<compile_context>
chip_gen: v7x
topology: tpu7x:2x2x1
jax: 0.10.0
libtpu: 0.0.40
codegen_flags: <defaults>
</compile_context>

<pallas_src>
import functools

import jax
import jax.numpy as jnp
from jax.experimental import pallas as pl
from jax.experimental.pallas import tpu as pltpu


def _round_up(x, m):
    return ((x + m - 1) // m) * m


def _cdiv(a, b):
    return (a + b - 1) // b


# -----------------------------------------------------------------------------
# Kernel: one batch tile, full encoder -> reparameterize -> decoder.
# -----------------------------------------------------------------------------
def cvae_kernel(
    xin_ref,                 # [TB, C + D + L]   bf16   = [onehot | x | eps]
    w1_ref, b1_ref,          # encoder linear 1  (rows ordered [onehot|x|eps(zeros)])
    w2_ref, b2_ref,          # encoder linear 2
    wml_ref, bml_ref,        # fused [fc_mu | fc_logvar], zero-padded to 128-lane mult
    wd1c_ref,                # decoder linear 1, class table [C, hidden] (resident)
    wd1z_ref, bd1_ref,       # decoder linear 1, z-part
    wd2_ref, bd2_ref,        # decoder linear 2
    wd3_ref, bd3_ref,        # decoder linear 3, zero-padded to 128-lane mult
    out_ref,                 # [TB, recon_pad + mulv_pad] f32 = [recon | mu | logvar]
    *,
    num_classes, input_dim, latent_dim,
):
    f32 = jnp.float32
    bf16 = jnp.bfloat16
    C, D, L = num_classes, input_dim, latent_dim
    recon_pad = wd3_ref.shape[1]

    xin = xin_ref[...]  # bf16

    # --- encoder (MXU bf16, f32 accumulation; ReLU on VPU in f32) ---
    # w1 has zero rows for the eps lanes, so no lane-slice is needed here.
    h = jnp.dot(xin, w1_ref[...], preferred_element_type=f32) + b1_ref[...]
    h = jnp.maximum(h, 0.0)
    h = jnp.dot(h.astype(bf16), w2_ref[...], preferred_element_type=f32) + b2_ref[...]
    h = jnp.maximum(h, 0.0)

    # --- fused mu/logvar projection (output lanes padded to a 128 multiple) ---
    mulv = jnp.dot(h.astype(bf16), wml_ref[...], preferred_element_type=f32) + bml_ref[...]
    mu = mulv[:, :L]
    logvar = mulv[:, L:2 * L]

    # --- reparameterize: z = mu + eps * exp(0.5*logvar); eps rides in the input slab ---
    # TODO(synk): torch.randn_like noise is supplied as an explicit eps input
    # (carried bf16 in the fused slab); in-kernel pltpu.prng_* would also work.
    eps = xin[:, C + D:].astype(f32)
    z = mu + eps * jnp.exp(0.5 * logvar)

    # --- decoder ---
    # onehot @ Wd1_c done in-kernel against the resident class table (tiny K matmul).
    cemb = jnp.dot(xin[:, :C], wd1c_ref[...], preferred_element_type=f32)
    hd = (jnp.dot(z.astype(bf16), wd1z_ref[...], preferred_element_type=f32)
          + cemb + bd1_ref[...])
    hd = jnp.maximum(hd, 0.0)
    hd = jnp.dot(hd.astype(bf16), wd2_ref[...], preferred_element_type=f32) + bd2_ref[...]
    hd = jnp.maximum(hd, 0.0)
    logits = jnp.dot(hd.astype(bf16), wd3_ref[...], preferred_element_type=f32) + bd3_ref[...]

    # sigmoid with a single EUP transcendental per element.
    recon = 0.5 * jnp.tanh(0.5 * logits) + 0.5

    # two lane-aligned (128-multiple) unmasked stores into one packed output slab.
    out_ref[:, :recon_pad] = recon
    out_ref[:, recon_pad:] = mulv


# -----------------------------------------------------------------------------
# Parameter setup (nn.Linear-like uniform init), pre-packed for the kernel layout.
# -----------------------------------------------------------------------------
def init_params(key, input_dim, hidden_dim, latent_dim, num_classes):
    def linear(k, fan_in, fan_out):
        k_w, k_b = jax.random.split(k)
        bound = fan_in ** -0.5
        w = jax.random.uniform(k_w, (fan_in, fan_out), jnp.float32, -bound, bound)
        b = jax.random.uniform(k_b, (1, fan_out), jnp.float32, -bound, bound)
        return w, b

    keys = jax.random.split(key, 7)
    # encoder linear 1: input rows ordered [onehot | x] (matches the kernel's slab)
    w1, b1 = linear(keys[0], num_classes + input_dim, hidden_dim)
    w2, b2 = linear(keys[1], hidden_dim, hidden_dim)
    wmu, bmu = linear(keys[2], hidden_dim, latent_dim)
    wlv, blv = linear(keys[3], hidden_dim, latent_dim)
    # decoder linear 1: input rows ordered [z | onehot]
    wd1, bd1 = linear(keys[4], latent_dim + num_classes, hidden_dim)
    wd2, bd2 = linear(keys[5], hidden_dim, hidden_dim)
    wd3, bd3 = linear(keys[6], hidden_dim, input_dim)

    bf16 = jnp.bfloat16
    recon_pad = _round_up(input_dim, 128)
    mulv_pad = _round_up(2 * latent_dim, 128)

    # encoder w1 extended with zero rows for the eps lanes of the fused input slab
    w1e = jnp.concatenate([w1, jnp.zeros((latent_dim, hidden_dim), jnp.float32)], axis=0)

    # fused [fc_mu | fc_logvar], zero-padded on the output lanes to a 128 multiple
    wml = jnp.zeros((hidden_dim, mulv_pad), jnp.float32)
    wml = wml.at[:, :latent_dim].set(wmu).at[:, latent_dim:2 * latent_dim].set(wlv)
    bml = jnp.zeros((1, mulv_pad), jnp.float32)
    bml = bml.at[:, :latent_dim].set(bmu).at[:, latent_dim:2 * latent_dim].set(blv)

    # decoder output layer zero-padded to a 128 multiple (lane-dense store)
    wd3p = jnp.zeros((hidden_dim, recon_pad), jnp.float32).at[:, :input_dim].set(wd3)
    bd3p = jnp.zeros((1, recon_pad), jnp.float32).at[:, :input_dim].set(bd3)

    return dict(
        # MXU weights stored bf16 (halves weight VMEM); biases stay f32.
        w1=w1e.astype(bf16), b1=b1,
        w2=w2.astype(bf16), b2=b2,
        wml=wml.astype(bf16), bml=bml,
        wd1_c=wd1[latent_dim:, :].astype(bf16),   # class table (resident, in-kernel matmul)
        wd1_z=wd1[:latent_dim, :].astype(bf16),
        bd1=bd1,
        wd2=wd2.astype(bf16), bd2=bd2,
        wd3=wd3p.astype(bf16), bd3=bd3p,
    )


# -----------------------------------------------------------------------------
# Wrapper: one-hot / slab packing in XLA, batch-gridded pallas_call.
# -----------------------------------------------------------------------------
@functools.partial(jax.jit, static_argnames=("num_classes",))
def cvae_forward(x, labels, eps, params, *, num_classes):
    B, input_dim = x.shape
    latent_dim = eps.shape[1]
    recon_pad = params["wd3"].shape[1]
    mulv_pad = params["wml"].shape[1]
    in_w = num_classes + input_dim + latent_dim
    out_w = recon_pad + mulv_pad

    onehot = jax.nn.one_hot(labels, num_classes, dtype=jnp.float32)
    # fused lane-contiguous bf16 input slab: [onehot | x | eps]
    xin = jnp.concatenate([onehot, x, eps], axis=1).astype(jnp.bfloat16)

    # Batch tile: multiple of 8 sublanes, capped at 512 rows; when the batch is
    # large enough, keep >= 2 grid steps so v7x's two TensorCores both get work.
    tiles = max(2, _cdiv(B, 512)) if B > 8 else 1
    TB = min(512, _round_up(_cdiv(B, tiles), 8))
    B_pad = _round_up(B, TB)
    pad = B_pad - B
    if pad:
        xin = jnp.pad(xin, ((0, pad), (0, 0)))

    def row_block(feat):
        return pl.BlockSpec((TB, feat), lambda i: (i, 0))

    def resident(arr):  # weights/biases: same full block for every grid step
        return pl.BlockSpec(arr.shape, lambda i: (0, 0))

    weights = (
        params["w1"], params["b1"],
        params["w2"], params["b2"],
        params["wml"], params["bml"],
        params["wd1_c"],
        params["wd1_z"], params["bd1"],
        params["wd2"], params["bd2"],
        params["wd3"], params["bd3"],
    )
    operands = (xin,) + weights
    in_specs = [row_block(in_w)] + [resident(w) for w in weights]

    kernel = functools.partial(
        cvae_kernel,
        num_classes=num_classes, input_dim=input_dim, latent_dim=latent_dim,
    )

    out = pl.pallas_call(
        kernel,
        out_shape=jax.ShapeDtypeStruct((B_pad, out_w), jnp.float32),
        grid=(B_pad // TB,),
        in_specs=in_specs,
        out_specs=row_block(out_w),
        compiler_params=pltpu.CompilerParams(
            dimension_semantics=("parallel",),
            # Above the 16/32 MiB scoped defaults (v5e/v6e), under v7x's 64 MiB.
            vmem_limit_bytes=48 * 1024 * 1024,
        ),
    )(*operands)

    recon = out[:B, :input_dim]
    mu = out[:B, recon_pad:recon_pad + latent_dim]
    logvar = out[:B, recon_pad + latent_dim:recon_pad + 2 * latent_dim]
    return recon, mu, logvar


# -----------------------------------------------------------------------------
# Plain-JAX reference (f32 math on the same stored params) for a sanity check.
# -----------------------------------------------------------------------------
def cvae_forward_ref(x, labels, eps, params, num_classes, input_dim, latent_dim):
    f32 = jnp.float32
    onehot = jax.nn.one_hot(labels, num_classes, dtype=f32)
    enc_in = jnp.concatenate([onehot, x], axis=1)
    w1 = params["w1"].astype(f32)[: num_classes + input_dim]
    h = jax.nn.relu(enc_in @ w1 + params["b1"])
    h = jax.nn.relu(h @ params["w2"].astype(f32) + params["b2"])
    mulv = h @ params["wml"].astype(f32) + params["bml"]
    mu, logvar = mulv[:, :latent_dim], mulv[:, latent_dim:2 * latent_dim]
    z = mu + eps * jnp.exp(0.5 * logvar)
    cemb = onehot @ params["wd1_c"].astype(f32)
    hd = jax.nn.relu(z @ params["wd1_z"].astype(f32) + cemb + params["bd1"])
    hd = jax.nn.relu(hd @ params["wd2"].astype(f32) + params["bd2"])
    logits = hd @ params["wd3"].astype(f32)[:, :input_dim] + params["bd3"][:, :input_dim]
    recon = jax.nn.sigmoid(logits)
    return recon, mu, logvar


if __name__ == "__main__":
    B, INPUT_DIM, HIDDEN_DIM, LATENT_DIM, NUM_CLASSES = 8, 16, 32, 8, 4

    key = jax.random.PRNGKey(0)
    k_params, k_x, k_labels, k_eps = jax.random.split(key, 4)

    params = init_params(k_params, INPUT_DIM, HIDDEN_DIM, LATENT_DIM, NUM_CLASSES)
    x = jax.random.uniform(k_x, (B, INPUT_DIM), jnp.float32)
    labels = jax.random.randint(k_labels, (B,), 0, NUM_CLASSES, dtype=jnp.int32)
    # torch.randn_like(std) -> standard-normal noise supplied as explicit input.
    eps = jax.random.normal(k_eps, (B, LATENT_DIM), jnp.float32)

    recon, mu, logvar = cvae_forward(x, labels, eps, params, num_classes=NUM_CLASSES)
    jax.block_until_ready((recon, mu, logvar))

    # The kernel carries eps in bf16 inside the fused input slab; compare against
    # the reference fed with the same quantized noise.
    eps_q = eps.astype(jnp.bfloat16).astype(jnp.float32)
    recon_r, mu_r, logvar_r = cvae_forward_ref(
        x, labels, eps_q, params, NUM_CLASSES, INPUT_DIM, LATENT_DIM)

    assert recon.shape == (B, INPUT_DIM)
    assert mu.shape == (B, LATENT_DIM) and logvar.shape == (B, LATENT_DIM)
    # bf16 MXU operands vs pure-f32 reference.
    assert jnp.allclose(recon, recon_r, atol=2e-2, rtol=2e-2)
    assert jnp.allclose(mu, mu_r, atol=2e-2, rtol=2e-2)
    assert jnp.allclose(logvar, logvar_r, atol=2e-2, rtol=2e-2)

    print("KERNEL_OK")
</pallas_src>

<mosaic_0001>
module attributes {stable_mosaic.version = 11 : i64} {
  func.func @cvae_kernel(%arg0: i32, %arg1: memref<8x28xbf16, #tpu.memory_space<vmem>>, %arg2: memref<28x32xbf16, #tpu.memory_space<vmem>>, %arg3: memref<1x32xf32, #tpu.memory_space<vmem>>, %arg4: memref<32x32xbf16, #tpu.memory_space<vmem>>, %arg5: memref<1x32xf32, #tpu.memory_space<vmem>>, %arg6: memref<32x128xbf16, #tpu.memory_space<vmem>>, %arg7: memref<1x128xf32, #tpu.memory_space<vmem>>, %arg8: memref<4x32xbf16, #tpu.memory_space<vmem>>, %arg9: memref<8x32xbf16, #tpu.memory_space<vmem>>, %arg10: memref<1x32xf32, #tpu.memory_space<vmem>>, %arg11: memref<32x32xbf16, #tpu.memory_space<vmem>>, %arg12: memref<1x32xf32, #tpu.memory_space<vmem>>, %arg13: memref<32x128xbf16, #tpu.memory_space<vmem>>, %arg14: memref<1x128xf32, #tpu.memory_space<vmem>>, %arg15: memref<8x256xf32, #tpu.memory_space<vmem>>) attributes {dimension_semantics = [#tpu.dimension_semantics<parallel>], iteration_bounds = array<i64: 1>, scalar_prefetch = 0 : i64, scratch_operands = 0 : i64, tpu.core_type = #tpu.core_type<tc>, window_params = [{transform_indices = @transform_0, window_bounds = array<i64: 8, 28>}, {pipeline_mode = #tpu.pipeline_mode<synchronous>, transform_indices = @transform_1, window_bounds = array<i64: 28, 32>}, {pipeline_mode = #tpu.pipeline_mode<synchronous>, transform_indices = @transform_2, window_bounds = array<i64: 1, 32>}, {pipeline_mode = #tpu.pipeline_mode<synchronous>, transform_indices = @transform_3, window_bounds = array<i64: 32, 32>}, {pipeline_mode = #tpu.pipeline_mode<synchronous>, transform_indices = @transform_4, window_bounds = array<i64: 1, 32>}, {pipeline_mode = #tpu.pipeline_mode<synchronous>, transform_indices = @transform_5, window_bounds = array<i64: 32, 128>}, {pipeline_mode = #tpu.pipeline_mode<synchronous>, transform_indices = @transform_6, window_bounds = array<i64: 1, 128>}, {pipeline_mode = #tpu.pipeline_mode<synchronous>, transform_indices = @transform_7, window_bounds = array<i64: 4, 32>}, {pipeline_mode = #tpu.pipeline_mode<synchronous>, transform_indices = @transform_8, window_bounds = array<i64: 8, 32>}, {pipeline_mode = #tpu.pipeline_mode<synchronous>, transform_indices = @transform_9, window_bounds = array<i64: 1, 32>}, {pipeline_mode = #tpu.pipeline_mode<synchronous>, transform_indices = @transform_10, window_bounds = array<i64: 32, 32>}, {pipeline_mode = #tpu.pipeline_mode<synchronous>, transform_indices = @transform_11, window_bounds = array<i64: 1, 32>}, {pipeline_mode = #tpu.pipeline_mode<synchronous>, transform_indices = @transform_12, window_bounds = array<i64: 32, 128>}, {pipeline_mode = #tpu.pipeline_mode<synchronous>, transform_indices = @transform_13, window_bounds = array<i64: 1, 128>}, {transform_indices = @transform_14, window_bounds = array<i64: 8, 256>}]} {
    %c0 = arith.constant 0 : index
    %c0_0 = arith.constant 0 : index
    %0 = vector.load %arg1[%c0, %c0_0] : memref<8x28xbf16, #tpu.memory_space<vmem>>, vector<8x28xbf16>
    %c0_1 = arith.constant 0 : index
    %c0_2 = arith.constant 0 : index
    %1 = vector.load %arg2[%c0_1, %c0_2] : memref<28x32xbf16, #tpu.memory_space<vmem>>, vector<28x32xbf16>
    %cst = arith.constant dense<0.000000e+00> : vector<8x32xf32>
    %2 = tpu.matmul %0, %1, %cst {dimension_numbers = #tpu.dot_dimension_numbers<[1], [0], [0], [1], [0, 0, 1, 1], [], []>} : vector<8x28xbf16>, vector<28x32xbf16>, vector<8x32xf32> -> vector<8x32xf32>
    %c0_3 = arith.constant 0 : index
    %c0_4 = arith.constant 0 : index
    %3 = vector.load %arg3[%c0_3, %c0_4] : memref<1x32xf32, #tpu.memory_space<vmem>>, vector<1x32xf32>
    %4 = vector.broadcast %3 : vector<1x32xf32> to vector<8x32xf32>
    %5 = arith.addf %2, %4 : vector<8x32xf32>
    %cst_5 = arith.constant 0.000000e+00 : f32
    %6 = vector.broadcast %cst_5 : f32 to vector<8x32xf32>
    %7 = arith.maximumf %5, %6 : vector<8x32xf32>
    %8 = arith.truncf %7 : vector<8x32xf32> to vector<8x32xbf16>
    %c0_6 = arith.constant 0 : index
    %c0_7 = arith.constant 0 : index
    %9 = vector.load %arg4[%c0_6, %c0_7] : memref<32x32xbf16, #tpu.memory_space<vmem>>, vector<32x32xbf16>
    %cst_8 = arith.constant dense<0.000000e+00> : vector<8x32xf32>
    %10 = tpu.matmul %8, %9, %cst_8 {dimension_numbers = #tpu.dot_dimension_numbers<[1], [0], [0], [1], [0, 0, 1, 1], [], []>} : vector<8x32xbf16>, vector<32x32xbf16>, vector<8x32xf32> -> vector<8x32xf32>
    %c0_9 = arith.constant 0 : index
    %c0_10 = arith.constant 0 : index
    %11 = vector.load %arg5[%c0_9, %c0_10] : memref<1x32xf32, #tpu.memory_space<vmem>>, vector<1x32xf32>
    %12 = vector.broadcast %11 : vector<1x32xf32> to vector<8x32xf32>
    %13 = arith.addf %10, %12 : vector<8x32xf32>
    %cst_11 = arith.constant 0.000000e+00 : f32
    %14 = vector.broadcast %cst_11 : f32 to vector<8x32xf32>
    %15 = arith.maximumf %13, %14 : vector<8x32xf32>
    %16 = arith.truncf %15 : vector<8x32xf32> to vector<8x32xbf16>
    %c0_12 = arith.constant 0 : index
    %c0_13 = arith.constant 0 : index
    %17 = vector.load %arg6[%c0_12, %c0_13] : memref<32x128xbf16, #tpu.memory_space<vmem>>, vector<32x128xbf16>
    %cst_14 = arith.constant dense<0.000000e+00> : vector<8x128xf32>
    %18 = tpu.matmul %16, %17, %cst_14 {dimension_numbers = #tpu.dot_dimension_numbers<[1], [0], [0], [1], [0, 0, 1, 1], [], []>} : vector<8x32xbf16>, vector<32x128xbf16>, vector<8x128xf32> -> vector<8x128xf32>
    %c0_15 = arith.constant 0 : index
    %c0_16 = arith.constant 0 : index
    %19 = vector.load %arg7[%c0_15, %c0_16] : memref<1x128xf32, #tpu.memory_space<vmem>>, vector<1x128xf32>
    %20 = vector.broadcast %19 : vector<1x128xf32> to vector<8x128xf32>
    %21 = arith.addf %18, %20 : vector<8x128xf32>
    %22 = vector.extract_strided_slice %21 {offsets = [0, 0], sizes = [8, 8], strides = [1, 1]} : vector<8x128xf32> to vector<8x8xf32>
    %23 = vector.extract_strided_slice %21 {offsets = [0, 8], sizes = [8, 8], strides = [1, 1]} : vector<8x128xf32> to vector<8x8xf32>
    %24 = vector.extract_strided_slice %0 {offsets = [0, 20], sizes = [8, 8], strides = [1, 1]} : vector<8x28xbf16> to vector<8x8xbf16>
    %25 = arith.extf %24 : vector<8x8xbf16> to vector<8x8xf32>
    %cst_17 = arith.constant 5.000000e-01 : f32
    %26 = vector.broadcast %cst_17 : f32 to vector<8x8xf32>
    %27 = arith.mulf %26, %23 : vector<8x8xf32>
    %28 = math.exp %27 : vector<8x8xf32>
    %29 = arith.mulf %25, %28 : vector<8x8xf32>
    %30 = arith.addf %22, %29 : vector<8x8xf32>
    %31 = vector.extract_strided_slice %0 {offsets = [0, 0], sizes = [8, 4], strides = [1, 1]} : vector<8x28xbf16> to vector<8x4xbf16>
    %c0_18 = arith.constant 0 : index
    %c0_19 = arith.constant 0 : index
    %32 = vector.load %arg8[%c0_18, %c0_19] : memref<4x32xbf16, #tpu.memory_space<vmem>>, vector<4x32xbf16>
    %cst_20 = arith.constant dense<0.000000e+00> : vector<8x32xf32>
    %33 = tpu.matmul %31, %32, %cst_20 {dimension_numbers = #tpu.dot_dimension_numbers<[1], [0], [0], [1], [0, 0, 1, 1], [], []>} : vector<8x4xbf16>, vector<4x32xbf16>, vector<8x32xf32> -> vector<8x32xf32>
    %34 = arith.truncf %30 : vector<8x8xf32> to vector<8x8xbf16>
    %c0_21 = arith.constant 0 : index
    %c0_22 = arith.constant 0 : index
    %35 = vector.load %arg9[%c0_21, %c0_22] : memref<8x32xbf16, #tpu.memory_space<vmem>>, vector<8x32xbf16>
    %cst_23 = arith.constant dense<0.000000e+00> : vector<8x32xf32>
    %36 = tpu.matmul %34, %35, %cst_23 {dimension_numbers = #tpu.dot_dimension_numbers<[1], [0], [0], [1], [0, 0, 1, 1], [], []>} : vector<8x8xbf16>, vector<8x32xbf16>, vector<8x32xf32> -> vector<8x32xf32>
    %37 = arith.addf %36, %33 : vector<8x32xf32>
    %c0_24 = arith.constant 0 : index
    %c0_25 = arith.constant 0 : index
    %38 = vector.load %arg10[%c0_24, %c0_25] : memref<1x32xf32, #tpu.memory_space<vmem>>, vector<1x32xf32>
    %39 = vector.broadcast %38 : vector<1x32xf32> to vector<8x32xf32>
    %40 = arith.addf %37, %39 : vector<8x32xf32>
    %cst_26 = arith.constant 0.000000e+00 : f32
    %41 = vector.broadcast %cst_26 : f32 to vector<8x32xf32>
    %42 = arith.maximumf %40, %41 : vector<8x32xf32>
    %43 = arith.truncf %42 : vector<8x32xf32> to vector<8x32xbf16>
    %c0_27 = arith.constant 0 : index
    %c0_28 = arith.constant 0 : index
    %44 = vector.load %arg11[%c0_27, %c0_28] : memref<32x32xbf16, #tpu.memory_space<vmem>>, vector<32x32xbf16>
    %cst_29 = arith.constant dense<0.000000e+00> : vector<8x32xf32>
    %45 = tpu.matmul %43, %44, %cst_29 {dimension_numbers = #tpu.dot_dimension_numbers<[1], [0], [0], [1], [0, 0, 1, 1], [], []>} : vector<8x32xbf16>, vector<32x32xbf16>, vector<8x32xf32> -> vector<8x32xf32>
    %c0_30 = arith.constant 0 : index
    %c0_31 = arith.constant 0 : index
    %46 = vector.load %arg12[%c0_30, %c0_31] : memref<1x32xf32, #tpu.memory_space<vmem>>, vector<1x32xf32>
    %47 = vector.broadcast %46 : vector<1x32xf32> to vector<8x32xf32>
    %48 = arith.addf %45, %47 : vector<8x32xf32>
    %cst_32 = arith.constant 0.000000e+00 : f32
    %49 = vector.broadcast %cst_32 : f32 to vector<8x32xf32>
    %50 = arith.maximumf %48, %49 : vector<8x32xf32>
    %51 = arith.truncf %50 : vector<8x32xf32> to vector<8x32xbf16>
    %c0_33 = arith.constant 0 : index
    %c0_34 = arith.constant 0 : index
    %52 = vector.load %arg13[%c0_33, %c0_34] : memref<32x128xbf16, #tpu.memory_space<vmem>>, vector<32x128xbf16>
    %cst_35 = arith.constant dense<0.000000e+00> : vector<8x128xf32>
    %53 = tpu.matmul %51, %52, %cst_35 {dimension_numbers = #tpu.dot_dimension_numbers<[1], [0], [0], [1], [0, 0, 1, 1], [], []>} : vector<8x32xbf16>, vector<32x128xbf16>, vector<8x128xf32> -> vector<8x128xf32>
    %c0_36 = arith.constant 0 : index
    %c0_37 = arith.constant 0 : index
    %54 = vector.load %arg14[%c0_36, %c0_37] : memref<1x128xf32, #tpu.memory_space<vmem>>, vector<1x128xf32>
    %55 = vector.broadcast %54 : vector<1x128xf32> to vector<8x128xf32>
    %56 = arith.addf %53, %55 : vector<8x128xf32>
    %cst_38 = arith.constant 5.000000e-01 : f32
    %57 = vector.broadcast %cst_38 : f32 to vector<8x128xf32>
    %58 = arith.mulf %57, %56 : vector<8x128xf32>
    %59 = math.tanh %58 : vector<8x128xf32>
    %cst_39 = arith.constant 5.000000e-01 : f32
    %60 = vector.broadcast %cst_39 : f32 to vector<8x128xf32>
    %61 = arith.mulf %60, %59 : vector<8x128xf32>
    %cst_40 = arith.constant 5.000000e-01 : f32
    %62 = vector.broadcast %cst_40 : f32 to vector<8x128xf32>
    %63 = arith.addf %61, %62 : vector<8x128xf32>
    %c0_41 = arith.constant 0 : index
    %c0_42 = arith.constant 0 : index
    %64 = vector.load %arg15[%c0_41, %c0_42] : memref<8x256xf32, #tpu.memory_space<vmem>>, vector<8x128xf32>
    tpu.vector_store %arg15[%c0_41, %c0_42], %63 {strides = array<i32>} : memref<8x256xf32, #tpu.memory_space<vmem>>, vector<8x128xf32>,
    %c0_43 = arith.constant 0 : index
    %c128 = arith.constant 128 : index
    %65 = vector.load %arg15[%c0_43, %c128] : memref<8x256xf32, #tpu.memory_space<vmem>>, vector<8x128xf32>
    tpu.vector_store %arg15[%c0_43, %c128], %21 {strides = array<i32>} : memref<8x256xf32, #tpu.memory_space<vmem>>, vector<8x128xf32>,
    return
  }
  func.func @transform_0(%arg0: i32) -> (i32, i32) {
    %c0_i32 = arith.constant 0 : i32
    %c0_i32_0 = arith.constant 0 : i32
    return %arg0, %c0_i32 : i32, i32
  }
  func.func @transform_1(%arg0: i32) -> (i32, i32) {
    %c0_i32 = arith.constant 0 : i32
    %c0_i32_0 = arith.constant 0 : i32
    %c0_i32_1 = arith.constant 0 : i32
    return %c0_i32, %c0_i32_0 : i32, i32
  }
  func.func @transform_2(%arg0: i32) -> (i32, i32) {
    %c0_i32 = arith.constant 0 : i32
    %c0_i32_0 = arith.constant 0 : i32
    %c0_i32_1 = arith.constant 0 : i32
    return %c0_i32, %c0_i32_0 : i32, i32
  }
  func.func @transform_3(%arg0: i32) -> (i32, i32) {
    %c0_i32 = arith.constant 0 : i32
    %c0_i32_0 = arith.constant 0 : i32
    %c0_i32_1 = arith.constant 0 : i32
    return %c0_i32, %c0_i32_0 : i32, i32
  }
  func.func @transform_4(%arg0: i32) -> (i32, i32) {
    %c0_i32 = arith.constant 0 : i32
    %c0_i32_0 = arith.constant 0 : i32
    %c0_i32_1 = arith.constant 0 : i32
    return %c0_i32, %c0_i32_0 : i32, i32
  }
  func.func @transform_5(%arg0: i32) -> (i32, i32) {
    %c0_i32 = arith.constant 0 : i32
    %c0_i32_0 = arith.constant 0 : i32
    %c0_i32_1 = arith.constant 0 : i32
    return %c0_i32, %c0_i32_0 : i32, i32
  }
  func.func @transform_6(%arg0: i32) -> (i32, i32) {
    %c0_i32 = arith.constant 0 : i32
    %c0_i32_0 = arith.constant 0 : i32
    %c0_i32_1 = arith.constant 0 : i32
    return %c0_i32, %c0_i32_0 : i32, i32
  }
  func.func @transform_7(%arg0: i32) -> (i32, i32) {
    %c0_i32 = arith.constant 0 : i32
    %c0_i32_0 = arith.constant 0 : i32
    %c0_i32_1 = arith.constant 0 : i32
    return %c0_i32, %c0_i32_0 : i32, i32
  }
  func.func @transform_8(%arg0: i32) -> (i32, i32) {
    %c0_i32 = arith.constant 0 : i32
    %c0_i32_0 = arith.constant 0 : i32
    %c0_i32_1 = arith.constant 0 : i32
    return %c0_i32, %c0_i32_0 : i32, i32
  }
  func.func @transform_9(%arg0: i32) -> (i32, i32) {
    %c0_i32 = arith.constant 0 : i32
    %c0_i32_0 = arith.constant 0 : i32
    %c0_i32_1 = arith.constant 0 : i32
    return %c0_i32, %c0_i32_0 : i32, i32
  }
  func.func @transform_10(%arg0: i32) -> (i32, i32) {
    %c0_i32 = arith.constant 0 : i32
    %c0_i32_0 = arith.constant 0 : i32
    %c0_i32_1 = arith.constant 0 : i32
    return %c0_i32, %c0_i32_0 : i32, i32
  }
  func.func @transform_11(%arg0: i32) -> (i32, i32) {
    %c0_i32 = arith.constant 0 : i32
    %c0_i32_0 = arith.constant 0 : i32
    %c0_i32_1 = arith.constant 0 : i32
    return %c0_i32, %c0_i32_0 : i32, i32
  }
  func.func @transform_12(%arg0: i32) -> (i32, i32) {
    %c0_i32 = arith.constant 0 : i32
    %c0_i32_0 = arith.constant 0 : i32
    %c0_i32_1 = arith.constant 0 : i32
    return %c0_i32, %c0_i32_0 : i32, i32
  }
  func.func @transform_13(%arg0: i32) -> (i32, i32) {
    %c0_i32 = arith.constant 0 : i32
    %c0_i32_0 = arith.constant 0 : i32
    %c0_i32_1 = arith.constant 0 : i32
    return %c0_i32, %c0_i32_0 : i32, i32
  }
  func.func @transform_14(%arg0: i32) -> (i32, i32) {
    %c0_i32 = arith.constant 0 : i32
    %c0_i32_0 = arith.constant 0 : i32
    return %arg0, %c0_i32 : i32, i32
  }
}

</mosaic_0001>

<llo_original>
// kernel: cvae_forward.1
$region0: #{cvae_forward.1}
  #allocation0 [shape = 'u32[]', space=smem, size = 0x4, offset = 0x4, fixed_abs, tag = 'smem constant byte address 0x4 - core index']
  #allocation1 [shape = 'u32[144,128]{1,0:T(1,128)}', space=vmem, size = 0x12000, scoped, tag = 'internal scratch']
  %s0 = inlined_call_operand.vmem [shape: bf16[8,28], index: 0, kind: input, shape index: {}]
  %s1 = inlined_call_operand.vmem [shape: bf16[28,32], index: 1, kind: input, shape index: {}]
  %s2 = inlined_call_operand.vmem [shape: f32[1,32], index: 2, kind: input, shape index: {}]
  %s3 = inlined_call_operand.vmem [shape: bf16[32,32], index: 3, kind: input, shape index: {}]
  %s4 = inlined_call_operand.vmem [shape: f32[1,32], index: 4, kind: input, shape index: {}]
  %s5 = inlined_call_operand.hbm [shape: bf16[32,128], index: 5, kind: input, shape index: {}]
  %s6 = inlined_call_operand.vmem [shape: f32[1,128], index: 6, kind: input, shape index: {}]
  %s7 = inlined_call_operand.vmem [shape: bf16[4,32], index: 7, kind: input, shape index: {}]
  %s8 = inlined_call_operand.hbm [shape: bf16[8,32], index: 8, kind: input, shape index: {}]
  %s9 = inlined_call_operand.vmem [shape: f32[1,32], index: 9, kind: input, shape index: {}]
  %s10 = inlined_call_operand.vmem [shape: bf16[32,32], index: 10, kind: input, shape index: {}]
  %s11 = inlined_call_operand.vmem [shape: f32[1,32], index: 11, kind: input, shape index: {}]
  %s12 = inlined_call_operand.hbm [shape: bf16[32,128], index: 12, kind: input, shape index: {}]
  %s13 = inlined_call_operand.vmem [shape: f32[1,128], index: 13, kind: input, shape index: {}]
  %s14 = inlined_call_operand.vmem [shape: f32[8,256], index: 14, kind: output, shape index: {}]
  %s15 = sld [smem:[#allocation0]]
  $region78: #{cvae_forward.1} parent=0
    _
  %s17 = ssub.s32 1, %s15
  %s18 = scalar_select 0, %s17, %s15
  $region1: #{cvae_forward.1} parent=0
    #allocation2 [shape = 'u8[8192]{0}', space=vmem, size = 0x2000, scoped, tag = 'input window, operand 5, single buffered']
    #allocation3 [shape = 's32[1]{0}', space=sflag, size = 0x4, scoped, tag = 'scoped memory for cvae_forward.1']
    #allocation4 [shape = 'u8[2048]{0}', space=vmem, size = 0x800, scoped, tag = 'input window, operand 8, single buffered']
    #allocation5 [shape = 's32[1]{0}', space=sflag, size = 0x4, scoped, tag = 'scoped memory for cvae_forward.1']
    #allocation6 [shape = 'u8[8192]{0}', space=vmem, size = 0x2000, scoped, tag = 'input window, operand 12, single buffered']
    %19 = vsyncpa [#allocation3], 0
    %20 = vsyncpa [#allocation5], 0
    // Predicated region
    $region2: #{cvae_forward.1} parent=1 // pred_check
      _
    $region3: #{cvae_forward.1} parent=1 // pred_check_branch
      %22 = sbr.rel (0) target = $region5
    $region4: #{cvae_forward.1} parent=1 // pred_region
      _
    $region5: #{cvae_forward.1} parent=1 // pred_fallthru
      _
    // Predicated region
    $region6: #{cvae_forward.1} parent=1 // pred_check
      _
    $region7: #{cvae_forward.1} parent=1 // pred_check_branch
      %24 = sbr.rel (0) target = $region9
    $region8: #{cvae_forward.1} parent=1 // pred_region
      _
    $region9: #{cvae_forward.1} parent=1 // pred_fallthru
      _
    // Predicated region
    $region10: #{cvae_forward.1} parent=1 // pred_check
      _
    $region11: #{cvae_forward.1} parent=1 // pred_check_branch
      %26 = sbr.rel (0) target = $region13
    $region12: #{cvae_forward.1} parent=1 // pred_region
      _
    $region13: #{cvae_forward.1} parent=1 // pred_fallthru
      _
    // Predicated region
    $region14: #{cvae_forward.1} parent=1 // pred_check
      _
    $region15: #{cvae_forward.1} parent=1 // pred_check_branch
      %28 = sbr.rel (0) target = $region17
    $region16: #{cvae_forward.1} parent=1 // pred_region
      _
    $region17: #{cvae_forward.1} parent=1 // pred_fallthru
      _
    // Predicated region
    $region18: #{cvae_forward.1} parent=1 // pred_check
      _
    $region19: #{cvae_forward.1} parent=1 // pred_check_branch
      %30 = sbr.rel (0) target = $region21
    $region20: #{cvae_forward.1} parent=1 // pred_region
      _
    $region21: #{cvae_forward.1} parent=1 // pred_fallthru
      _
    // Predicated region
    $region22: #{cvae_forward.1} parent=1 // pred_check
      _
    $region23: #{cvae_forward.1} parent=1 // pred_check_branch
      %32 = sbr.rel (0) target = $region25
    $region24: #{cvae_forward.1} parent=1 // pred_region
      %s34 = ssub.s32 256, 256
      %35 = vsyncadd [#allocation3], %s34
      %s36 = sshll.u32 [#allocation2], 4
      %s37 = int_to_ptr.vmem [resolvable:$true] %s36
      %42 = dma.hbm_to_vmem [thread:$0]  %s5, 256, %s37, [#allocation3], 64, 64, 4
    $region25: #{cvae_forward.1} parent=1 // pred_fallthru
      _
    // Predicated region
    $region26: #{cvae_forward.1} parent=1 // pred_check
      _
    $region27: #{cvae_forward.1} parent=1 // pred_check_branch
      %44 = sbr.rel (0) target = $region29
    $region28: #{cvae_forward.1} parent=1 // pred_region
      _
    $region29: #{cvae_forward.1} parent=1 // pred_fallthru
      _
    // Predicated region
    $region30: #{cvae_forward.1} parent=1 // pred_check
      _
    $region31: #{cvae_forward.1} parent=1 // pred_check_branch
      %46 = sbr.rel (0) target = $region33
    $region32: #{cvae_forward.1} parent=1 // pred_region
      _
    $region33: #{cvae_forward.1} parent=1 // pred_fallthru
      _
    // Predicated region
    $region34: #{cvae_forward.1} parent=1 // pred_check
      _
    $region35: #{cvae_forward.1} parent=1 // pred_check_branch
      %48 = sbr.rel (0) target = $region37
    $region36: #{cvae_forward.1} parent=1 // pred_region
      %s50 = ssub.s32 64, 64
      %51 = vsyncadd [#allocation5], %s50
      %s53 = sshll.u32 [#allocation4], 4
      %s54 = int_to_ptr.vmem [resolvable:$true] %s53
      %56 = dma.hbm_to_vmem [thread:$0]  %s8, 64, %s54, [#allocation5]
    $region37: #{cvae_forward.1} parent=1 // pred_fallthru
      _
    // Predicated region
    $region38: #{cvae_forward.1} parent=1 // pred_check
      _
    $region39: #{cvae_forward.1} parent=1 // pred_check_branch
      %58 = sbr.rel (0) target = $region41
    $region40: #{cvae_forward.1} parent=1 // pred_region
      _
    $region41: #{cvae_forward.1} parent=1 // pred_fallthru
      _
    // Predicated region
    $region42: #{cvae_forward.1} parent=1 // pred_check
      _
    $region43: #{cvae_forward.1} parent=1 // pred_check_branch
      %60 = sbr.rel (0) target = $region45
    $region44: #{cvae_forward.1} parent=1 // pred_region
      _
    $region45: #{cvae_forward.1} parent=1 // pred_fallthru
      _
    // Predicated region
    $region46: #{cvae_forward.1} parent=1 // pred_check
      _
    $region47: #{cvae_forward.1} parent=1 // pred_check_branch
      %62 = sbr.rel (0) target = $region49
    $region48: #{cvae_forward.1} parent=1 // pred_region
      _
    $region49: #{cvae_forward.1} parent=1 // pred_fallthru
      _
    // Predicated region
    $region50: #{cvae_forward.1} parent=1 // pred_check
      _
    $region51: #{cvae_forward.1} parent=1 // pred_check_branch
      %64 = sbr.rel (0) target = $region53
    $region52: #{cvae_forward.1} parent=1 // pred_region
      %s66 = ssub.s32 256, 256
      %67 = vsyncadd [#allocation5], %s66
      %s68 = sshll.u32 [#allocation6], 4
      %s69 = int_to_ptr.vmem [resolvable:$true] %s68
      %74 = dma.hbm_to_vmem [thread:$0]  %s12, 256, %s69, [#allocation5], 64, 64, 4
    $region53: #{cvae_forward.1} parent=1 // pred_fallthru
      _
    // Predicated region
    $region54: #{cvae_forward.1} parent=1 // pred_check
      _
    $region55: #{cvae_forward.1} parent=1 // pred_check_branch
      %76 = sbr.rel (0) target = $region57
    $region56: #{cvae_forward.1} parent=1 // pred_region
      _
    $region57: #{cvae_forward.1} parent=1 // pred_fallthru
      _
    // Predicated region
    $region58: #{cvae_forward.1} parent=1 // pred_check
      _
    $region59: #{cvae_forward.1} parent=1 // pred_check_branch
      %78 = sbr.rel (0) target = $region61
    $region60: #{cvae_forward.1} parent=1 // pred_region
      %79 = dma.done [#allocation3], 256
    $region61: #{cvae_forward.1} parent=1 // pred_fallthru
      _
    // Predicated region
    $region62: #{cvae_forward.1} parent=1 // pred_check
      _
    $region63: #{cvae_forward.1} parent=1 // pred_check_branch
      %81 = sbr.rel (0) target = $region65
    $region64: #{cvae_forward.1} parent=1 // pred_region
      %82 = dma.done [#allocation5], 64
    $region65: #{cvae_forward.1} parent=1 // pred_fallthru
      _
    // Predicated region
    $region66: #{cvae_forward.1} parent=1 // pred_check
      _
    $region67: #{cvae_forward.1} parent=1 // pred_check_branch
      %84 = sbr.rel (0) target = $region69
    $region68: #{cvae_forward.1} parent=1 // pred_region
      %85 = dma.done [#allocation5], 256
    $region69: #{cvae_forward.1} parent=1 // pred_fallthru
      _
    %v87 = vld [vmem:[%s0] sm:$0xf]
    %v88 = vld [vmem:[%s1] sm:$0xf]
    %v89 = vld [vmem:[%s1 + $0x4] sm:$0xf]
    %v90 = vld [vmem:[%s1 + $0x8] sm:$0xf]
    %v91 = vld [vmem:[%s1 + $0xc] sm:$0x3]
    %v92 = vld [vmem:[%s2] sm:$0x1]
    %v94 = vlaneseq
    %v95 = vshrl.u32 %v94, 7
    %v96 = vsub.s32 0, %v95
    %v97 = vrot.slane %v92, %v96
    %v103 = vunpack.c.l.b16 %v88
    %v104 = vunpack.c.l.b16 %v89
    %v105 = vunpack.c.l.b16 %v90
    %v106 = vunpack.c.l.b16 %v91
    %v107 = vpack.c.b16 %v104, %v103
    %v108 = vpack.c.b16 %v106, %v105
    %vm110 = vcmask 228352
    %v112 = vsel %vm110, %v87, 0
    %vm114 = vcmask 1045504
    %v116 = vsel %vm114, %v108, 0
    %118 = vmatprep.subr.bf16.mxu0 0
    %119 = vmatpush1.bf16.msra.mxu0 %v107
    %120 = vmatprep.subr.bf16.mxu0 0
    %121 = vmatpush1.bf16.msra.mxu0 %v116
    %122 = vmatprep.subr.bf16.mxu0 0
    %123 = vmatpush1.bf16.msra.mxu0 0
    %124 = vmatprep.subr.bf16.mxu0 0
    %125 = vmatpush1.bf16.msra.mxu0 0
    %126 = vmatprep.subr.bf16.mxu0 0
    %127 = vmatpush1.bf16.msra.mxu0 0
    %128 = vmatprep.subr.bf16.mxu0 0
    %129 = vmatpush1.bf16.msra.mxu0 0
    %130 = vmatprep.subr.bf16.mxu0 0
    %131 = vmatpush1.bf16.msra.mxu0 0
    %132 = vmatprep.subr.bf16.mxu0 0
    %133 = vmatpush1.bf16.msra.mxu0 0
    %134 = vmatprep.subr.bf16.mxu0 0
    %135 = vmatpush1.bf16.msra.mxu0 0
    %136 = vmatprep.subr.bf16.mxu0 0
    %137 = vmatpush1.bf16.msra.mxu0 0
    %138 = vmatprep.subr.bf16.mxu0 0
    %139 = vmatpush1.bf16.msra.mxu0 0
    %140 = vmatprep.subr.bf16.mxu0 0
    %141 = vmatpush1.bf16.msra.mxu0 0
    %142 = vmatprep.subr.bf16.mxu0 0
    %143 = vmatpush1.bf16.msra.mxu0 0
    %144 = vmatprep.subr.bf16.mxu0 0
    %145 = vmatpush1.bf16.msra.mxu0 0
    %146 = vmatprep.subr.bf16.mxu0 0
    %147 = vmatpush1.bf16.msra.mxu0 0
    %148 = vmatprep.subr.bf16.mxu0 0
    %149 = vmatpush1.bf16.msra.mxu0 0
    %150 = vmatprep.mubr.bf16.mxu0 0
    %151 = vmatmul.mubr.bf16.gmra.mrb[0].mxu0 %v112
    %v152 = vpop.f32.mrb[0].mxu0
    %v153 = vadd.f32 %v97, %v152
    %v154 = vpop.f32.mrb[0].mxu0
    %v155 = vpop.f32.mrb[0].mxu0
    %v156 = vpop.f32.mrb[0].mxu0
    %157 = vdwg.mxu0
    %v158 = vmax.f32 %v153, 0.0
    %v159 = vpack.c.bf16 %v158, %v158
    %v160 = vld [vmem:[%s3] sm:$0xf]
    %v161 = vld [vmem:[%s3 + $0x4] sm:$0xf]
    %v162 = vld [vmem:[%s3 + $0x8] sm:$0xf]
    %v163 = vld [vmem:[%s3 + $0xc] sm:$0xf]
    %v164 = vld [vmem:[%s4] sm:$0x1]
    %v166 = vlaneseq
    %v167 = vshrl.u32 %v166, 7
    %v168 = vsub.s32 0, %v167
    %v169 = vrot.slane %v164, %v168
    %v175 = vunpack.c.l.b16 %v160
    %v176 = vunpack.c.l.b16 %v161
    %v177 = vunpack.c.l.b16 %v162
    %v178 = vunpack.c.l.b16 %v163
    %v179 = vpack.c.b16 %v176, %v175
    %v180 = vpack.c.b16 %v178, %v177
    %vm183 = vcmask 261120
    %v185 = vsel %vm183, %v159, 0
    %187 = vmatprep.subr.bf16.mxu0 0
    %188 = vmatpush1.bf16.msra.mxu0 %v179
    %189 = vmatprep.subr.bf16.mxu0 0
    %190 = vmatpush1.bf16.msra.mxu0 %v180
    %191 = vmatprep.subr.bf16.mxu0 0
    %192 = vmatpush1.bf16.msra.mxu0 0
    %193 = vmatprep.subr.bf16.mxu0 0
    %194 = vmatpush1.bf16.msra.mxu0 0
    %195 = vmatprep.subr.bf16.mxu0 0
    %196 = vmatpush1.bf16.msra.mxu0 0
    %197 = vmatprep.subr.bf16.mxu0 0
    %198 = vmatpush1.bf16.msra.mxu0 0
    %199 = vmatprep.subr.bf16.mxu0 0
    %200 = vmatpush1.bf16.msra.mxu0 0
    %201 = vmatprep.subr.bf16.mxu0 0
    %202 = vmatpush1.bf16.msra.mxu0 0
    %203 = vmatprep.subr.bf16.mxu0 0
    %204 = vmatpush1.bf16.msra.mxu0 0
    %205 = vmatprep.subr.bf16.mxu0 0
    %206 = vmatpush1.bf16.msra.mxu0 0
    %207 = vmatprep.subr.bf16.mxu0 0
    %208 = vmatpush1.bf16.msra.mxu0 0
    %209 = vmatprep.subr.bf16.mxu0 0
    %210 = vmatpush1.bf16.msra.mxu0 0
    %211 = vmatprep.subr.bf16.mxu0 0
    %212 = vmatpush1.bf16.msra.mxu0 0
    %213 = vmatprep.subr.bf16.mxu0 0
    %214 = vmatpush1.bf16.msra.mxu0 0
    %215 = vmatprep.subr.bf16.mxu0 0
    %216 = vmatpush1.bf16.msra.mxu0 0
    %217 = vmatprep.subr.bf16.mxu0 0
    %218 = vmatpush1.bf16.msra.mxu0 0
    %219 = vmatprep.mubr.bf16.mxu0 0
    %220 = vmatmul.mubr.bf16.gmra.mrb[0].mxu0 %v185
    %v221 = vpop.f32.mrb[0].mxu0
    %v222 = vadd.f32 %v169, %v221
    %v223 = vpop.f32.mrb[0].mxu0
    %v224 = vpop.f32.mrb[0].mxu0
    %v225 = vpop.f32.mrb[0].mxu0
    %226 = vdwg.mxu0
    %v227 = vmax.f32 %v222, 0.0
    %v228 = vpack.c.bf16 %v227, %v227
    %v229 = vld [vmem:[#allocation2] sm:$0xf]
    %v230 = vld [vmem:[#allocation2 + $0x4] sm:$0xf]
    %v231 = vld [vmem:[#allocation2 + $0x8] sm:$0xf]
    %v232 = vld [vmem:[#allocation2 + $0xc] sm:$0xf]
    %v233 = vld [vmem:[%s6] sm:$0x1]
    %v235 = vlaneseq
    %v236 = vshrl.u32 %v235, 7
    %v237 = vsub.s32 0, %v236
    %v238 = vrot.slane %v233, %v237
    %v244 = vunpack.c.l.b16 %v229
    %v245 = vunpack.c.l.b16 %v230
    %v246 = vunpack.c.l.b16 %v231
    %v247 = vunpack.c.l.b16 %v232
    %v248 = vpack.c.b16 %v245, %v244
    %v249 = vpack.c.b16 %v247, %v246
    %v253 = vsel %vm183, %v228, 0
    %255 = vmatprep.subr.bf16.mxu0 0
    %256 = vmatpush1.bf16.msra.mxu0 %v248
    %257 = vmatprep.subr.bf16.mxu0 0
    %258 = vmatpush1.bf16.msra.mxu0 %v249
    %259 = vmatprep.subr.bf16.mxu0 0
    %260 = vmatpush1.bf16.msra.mxu0 0
    %261 = vmatprep.subr.bf16.mxu0 0
    %262 = vmatpush1.bf16.msra.mxu0 0
    %263 = vmatprep.subr.bf16.mxu0 0
    %264 = vmatpush1.bf16.msra.mxu0 0
    %265 = vmatprep.subr.bf16.mxu0 0
    %266 = vmatpush1.bf16.msra.mxu0 0
    %267 = vmatprep.subr.bf16.mxu0 0
    %268 = vmatpush1.bf16.msra.mxu0 0
    %269 = vmatprep.subr.bf16.mxu0 0
    %270 = vmatpush1.bf16.msra.mxu0 0
    %271 = vmatprep.subr.bf16.mxu0 0
    %272 = vmatpush1.bf16.msra.mxu0 0
    %273 = vmatprep.subr.bf16.mxu0 0
    %274 = vmatpush1.bf16.msra.mxu0 0
    %275 = vmatprep.subr.bf16.mxu0 0
    %276 = vmatpush1.bf16.msra.mxu0 0
    %277 = vmatprep.subr.bf16.mxu0 0
    %278 = vmatpush1.bf16.msra.mxu0 0
    %279 = vmatprep.subr.bf16.mxu0 0
    %280 = vmatpush1.bf16.msra.mxu0 0
    %281 = vmatprep.subr.bf16.mxu0 0
    %282 = vmatpush1.bf16.msra.mxu0 0
    %283 = vmatprep.subr.bf16.mxu0 0
    %284 = vmatpush1.bf16.msra.mxu0 0
    %285 = vmatprep.subr.bf16.mxu0 0
    %286 = vmatpush1.bf16.msra.mxu0 0
    %287 = vmatprep.mubr.bf16.mxu0 0
    %288 = vmatmul.mubr.bf16.gmra.mrb[0].mxu0 %v253
    %v289 = vpop.f32.mrb[0].mxu0
    %v290 = vadd.f32 %v238, %v289
    %v291 = vpop.f32.mrb[0].mxu0
    %v292 = vpop.f32.mrb[0].mxu0
    %v293 = vpop.f32.mrb[0].mxu0
    %294 = vdwg.mxu0
    %v295 = vunpack.c.l.bf16 %v87
    %v296 = vmul.f32 %v290, 0.5
    %v297 = vmul.f32 %v296, 1.442695
    %v298 = vpow.pop %v297
    %300 = vrot.lane.b32.xlu0 %v298, 12
    %v301 = vpop.permute.xlu0 %300
    %v303 = vmul.f32 %v295, %v301
    %305 = vrot.lane.b32.xlu0 %v303, 108
    %v306 = vpop.permute.xlu0 %305
    %v308 = vadd.f32 %v290, %v306
    %v309 = vld [vmem:[%s7] sm:$0x3]
    %vm310 = vcmask 31744
    %v311 = vsel %vm310, %v87, 0
    %vm313 = vcmask 1041408
    %v315 = vsel %vm313, %v309, 0
    %317 = vmatprep.subr.bf16.mxu0 0
    %318 = vmatpush1.bf16.msra.mxu0 %v315
    %319 = vmatprep.subr.bf16.mxu0 0
    %320 = vmatpush1.bf16.msra.mxu0 0
    %321 = vmatprep.subr.bf16.mxu0 0
    %322 = vmatpush1.bf16.msra.mxu0 0
    %323 = vmatprep.subr.bf16.mxu0 0
    %324 = vmatpush1.bf16.msra.mxu0 0
    %325 = vmatprep.subr.bf16.mxu0 0
    %326 = vmatpush1.bf16.msra.mxu0 0
    %327 = vmatprep.subr.bf16.mxu0 0
    %328 = vmatpush1.bf16.msra.mxu0 0
    %329 = vmatprep.subr.bf16.mxu0 0
    %330 = vmatpush1.bf16.msra.mxu0 0
    %331 = vmatprep.subr.bf16.mxu0 0
    %332 = vmatpush1.bf16.msra.mxu0 0
    %333 = vmatprep.subr.bf16.mxu0 0
    %334 = vmatpush1.bf16.msra.mxu0 0
    %335 = vmatprep.subr.bf16.mxu0 0
    %336 = vmatpush1.bf16.msra.mxu0 0
    %337 = vmatprep.subr.bf16.mxu0 0
    %338 = vmatpush1.bf16.msra.mxu0 0
    %339 = vmatprep.subr.bf16.mxu0 0
    %340 = vmatpush1.bf16.msra.mxu0 0
    %341 = vmatprep.subr.bf16.mxu0 0
    %342 = vmatpush1.bf16.msra.mxu0 0
    %343 = vmatprep.subr.bf16.mxu0 0
    %344 = vmatpush1.bf16.msra.mxu0 0
    %345 = vmatprep.subr.bf16.mxu0 0
    %346 = vmatpush1.bf16.msra.mxu0 0
    %347 = vmatprep.subr.bf16.mxu0 0
    %348 = vmatpush1.bf16.msra.mxu0 0
    %349 = vmatprep.mubr.bf16.mxu0 0
    %350 = vmatmul.mubr.bf16.gmra.mrb[0].mxu0 %v311
    %v351 = vpop.f32.mrb[0].mxu0
    %v352 = vadd.f32 0.0, %v351
    %v353 = vpop.f32.mrb[0].mxu0
    %v354 = vpop.f32.mrb[0].mxu0
    %v355 = vpop.f32.mrb[0].mxu0
    %356 = vdwg.mxu0
    %v357 = vpack.c.bf16 %v308, %v308
    %v358 = vld [vmem:[#allocation4] sm:$0xf]
    %vm359 = vcmask 64512
    %v361 = vsel %vm359, %v357, 0
    %vm363 = vcmask 1043456
    %v365 = vsel %vm363, %v358, 0
    %367 = vmatprep.subr.bf16.mxu0 0
    %368 = vmatpush1.bf16.msra.mxu0 %v365
    %369 = vmatprep.subr.bf16.mxu0 0
    %370 = vmatpush1.bf16.msra.mxu0 0
    %371 = vmatprep.subr.bf16.mxu0 0
    %372 = vmatpush1.bf16.msra.mxu0 0
    %373 = vmatprep.subr.bf16.mxu0 0
    %374 = vmatpush1.bf16.msra.mxu0 0
    %375 = vmatprep.subr.bf16.mxu0 0
    %376 = vmatpush1.bf16.msra.mxu0 0
    %377 = vmatprep.subr.bf16.mxu0 0
    %378 = vmatpush1.bf16.msra.mxu0 0
    %379 = vmatprep.subr.bf16.mxu0 0
    %380 = vmatpush1.bf16.msra.mxu0 0
    %381 = vmatprep.subr.bf16.mxu0 0
    %382 = vmatpush1.bf16.msra.mxu0 0
    %383 = vmatprep.subr.bf16.mxu0 0
    %384 = vmatpush1.bf16.msra.mxu0 0
    %385 = vmatprep.subr.bf16.mxu0 0
    %386 = vmatpush1.bf16.msra.mxu0 0
    %387 = vmatprep.subr.bf16.mxu0 0
    %388 = vmatpush1.bf16.msra.mxu0 0
    %389 = vmatprep.subr.bf16.mxu0 0
    %390 = vmatpush1.bf16.msra.mxu0 0
    %391 = vmatprep.subr.bf16.mxu0 0
    %392 = vmatpush1.bf16.msra.mxu0 0
    %393 = vmatprep.subr.bf16.mxu0 0
    %394 = vmatpush1.bf16.msra.mxu0 0
    %395 = vmatprep.subr.bf16.mxu0 0
    %396 = vmatpush1.bf16.msra.mxu0 0
    %397 = vmatprep.subr.bf16.mxu0 0
    %398 = vmatpush1.bf16.msra.mxu0 0
    %399 = vmatprep.mubr.bf16.mxu0 0
    %400 = vmatmul.mubr.bf16.gmra.mrb[0].mxu0 %v361
    %v401 = vpop.f32.mrb[0].mxu0
    %v402 = vadd.f32 %v352, %v401
    %v403 = vpop.f32.mrb[0].mxu0
    %v404 = vpop.f32.mrb[0].mxu0
    %v405 = vpop.f32.mrb[0].mxu0
    %406 = vdwg.mxu0
    %v407 = vld [vmem:[%s9] sm:$0x1]
    %v409 = vlaneseq
    %v410 = vshrl.u32 %v409, 7
    %v411 = vsub.s32 0, %v410
    %v412 = vrot.slane %v407, %v411
    %v414 = vadd.f32 %v402, %v412
    %v415 = vmax.f32 %v414, 0.0
    %v416 = vpack.c.bf16 %v415, %v415
    %v417 = vld [vmem:[%s10] sm:$0xf]
    %v418 = vld [vmem:[%s10 + $0x4] sm:$0xf]
    %v419 = vld [vmem:[%s10 + $0x8] sm:$0xf]
    %v420 = vld [vmem:[%s10 + $0xc] sm:$0xf]
    %v421 = vld [vmem:[%s11] sm:$0x1]
    %v423 = vlaneseq
    %v424 = vshrl.u32 %v423, 7
    %v425 = vsub.s32 0, %v424
    %v426 = vrot.slane %v421, %v425
    %v432 = vunpack.c.l.b16 %v417
    %v433 = vunpack.c.l.b16 %v418
    %v434 = vunpack.c.l.b16 %v419
    %v435 = vunpack.c.l.b16 %v420
    %v436 = vpack.c.b16 %v433, %v432
    %v437 = vpack.c.b16 %v435, %v434
    %v441 = vsel %vm183, %v416, 0
    %443 = vmatprep.subr.bf16.mxu0 0
    %444 = vmatpush1.bf16.msra.mxu0 %v436
    %445 = vmatprep.subr.bf16.mxu0 0
    %446 = vmatpush1.bf16.msra.mxu0 %v437
    %447 = vmatprep.subr.bf16.mxu0 0
    %448 = vmatpush1.bf16.msra.mxu0 0
    %449 = vmatprep.subr.bf16.mxu0 0
    %450 = vmatpush1.bf16.msra.mxu0 0
    %451 = vmatprep.subr.bf16.mxu0 0
    %452 = vmatpush1.bf16.msra.mxu0 0
    %453 = vmatprep.subr.bf16.mxu0 0
    %454 = vmatpush1.bf16.msra.mxu0 0
    %455 = vmatprep.subr.bf16.mxu0 0
    %456 = vmatpush1.bf16.msra.mxu0 0
    %457 = vmatprep.subr.bf16.mxu0 0
    %458 = vmatpush1.bf16.msra.mxu0 0
    %459 = vmatprep.subr.bf16.mxu0 0
    %460 = vmatpush1.bf16.msra.mxu0 0
    %461 = vmatprep.subr.bf16.mxu0 0
    %462 = vmatpush1.bf16.msra.mxu0 0
    %463 = vmatprep.subr.bf16.mxu0 0
    %464 = vmatpush1.bf16.msra.mxu0 0
    %465 = vmatprep.subr.bf16.mxu0 0
    %466 = vmatpush1.bf16.msra.mxu0 0
    %467 = vmatprep.subr.bf16.mxu0 0
    %468 = vmatpush1.bf16.msra.mxu0 0
    %469 = vmatprep.subr.bf16.mxu0 0
    %470 = vmatpush1.bf16.msra.mxu0 0
    %471 = vmatprep.subr.bf16.mxu0 0
    %472 = vmatpush1.bf16.msra.mxu0 0
    %473 = vmatprep.subr.bf16.mxu0 0
    %474 = vmatpush1.bf16.msra.mxu0 0
    %475 = vmatprep.mubr.bf16.mxu0 0
    %476 = vmatmul.mubr.bf16.gmra.mrb[0].mxu0 %v441
    %v477 = vpop.f32.mrb[0].mxu0
    %v478 = vadd.f32 %v426, %v477
    %v479 = vpop.f32.mrb[0].mxu0
    %v480 = vpop.f32.mrb[0].mxu0
    %v481 = vpop.f32.mrb[0].mxu0
    %482 = vdwg.mxu0
    %v483 = vmax.f32 %v478, 0.0
    %v484 = vpack.c.bf16 %v483, %v483
    %v485 = vld [vmem:[#allocation6] sm:$0xf]
    %v486 = vld [vmem:[#allocation6 + $0x4] sm:$0xf]
    %v487 = vld [vmem:[#allocation6 + $0x8] sm:$0xf]
    %v488 = vld [vmem:[#allocation6 + $0xc] sm:$0xf]
    %v489 = vld [vmem:[%s13] sm:$0x1]
    %v491 = vlaneseq
    %v492 = vshrl.u32 %v491, 7
    %v493 = vsub.s32 0, %v492
    %v494 = vrot.slane %v489, %v493
    %v500 = vunpack.c.l.b16 %v485
    %v501 = vunpack.c.l.b16 %v486
    %v502 = vunpack.c.l.b16 %v487
    %v503 = vunpack.c.l.b16 %v488
    %v504 = vpack.c.b16 %v501, %v500
    %v505 = vpack.c.b16 %v503, %v502
    %v509 = vsel %vm183, %v484, 0
    %511 = vmatprep.subr.bf16.mxu0 0
    %512 = vmatpush1.bf16.msra.mxu0 %v504
    %513 = vmatprep.subr.bf16.mxu0 0
    %514 = vmatpush1.bf16.msra.mxu0 %v505
    %515 = vmatprep.subr.bf16.mxu0 0
    %516 = vmatpush1.bf16.msra.mxu0 0
    %517 = vmatprep.subr.bf16.mxu0 0
    %518 = vmatpush1.bf16.msra.mxu0 0
    %519 = vmatprep.subr.bf16.mxu0 0
    %520 = vmatpush1.bf16.msra.mxu0 0
    %521 = vmatprep.subr.bf16.mxu0 0
    %522 = vmatpush1.bf16.msra.mxu0 0
    %523 = vmatprep.subr.bf16.mxu0 0
    %524 = vmatpush1.bf16.msra.mxu0 0
    %525 = vmatprep.subr.bf16.mxu0 0
    %526 = vmatpush1.bf16.msra.mxu0 0
    %527 = vmatprep.subr.bf16.mxu0 0
    %528 = vmatpush1.bf16.msra.mxu0 0
    %529 = vmatprep.subr.bf16.mxu0 0
    %530 = vmatpush1.bf16.msra.mxu0 0
    %531 = vmatprep.subr.bf16.mxu0 0
    %532 = vmatpush1.bf16.msra.mxu0 0
    %533 = vmatprep.subr.bf16.mxu0 0
    %534 = vmatpush1.bf16.msra.mxu0 0
    %535 = vmatprep.subr.bf16.mxu0 0
    %536 = vmatpush1.bf16.msra.mxu0 0
    %537 = vmatprep.subr.bf16.mxu0 0
    %538 = vmatpush1.bf16.msra.mxu0 0
    %539 = vmatprep.subr.bf16.mxu0 0
    %540 = vmatpush1.bf16.msra.mxu0 0
    %541 = vmatprep.subr.bf16.mxu0 0
    %542 = vmatpush1.bf16.msra.mxu0 0
    %543 = vmatprep.mubr.bf16.mxu0 0
    %544 = vmatmul.mubr.bf16.gmra.mrb[0].mxu0 %v509
    %v545 = vpop.f32.mrb[0].mxu0
    %v546 = vadd.f32 %v494, %v545
    %v547 = vpop.f32.mrb[0].mxu0
    %v548 = vpop.f32.mrb[0].mxu0
    %v549 = vpop.f32.mrb[0].mxu0
    %550 = vdwg.mxu0
    %v551 = vmul.f32 %v546, 0.5
    %v552 = vtanh.pop %v551
    %v553 = vmul.f32 %v552, 0.5
    %v554 = vadd.f32 %v553, 0.5
    %555 = vst [vmem:[%s14] sm:$0xff] %v554
    %556 = vst [vmem:[%s14 + $0x8] sm:$0xff] %v290
    // Predicated region
    $region70: #{cvae_forward.1} parent=1 // pred_check
      _
    $region71: #{cvae_forward.1} parent=1 // pred_check_branch
      %558 = sbr.rel (0) target = $region73
    $region72: #{cvae_forward.1} parent=1 // pred_region
      _
    $region73: #{cvae_forward.1} parent=1 // pred_fallthru
      _
    // Predicated region
    $region74: #{cvae_forward.1} parent=1 // pred_check
      _
    $region75: #{cvae_forward.1} parent=1 // pred_check_branch
      %560 = sbr.rel (0) target = $region77
    $region76: #{cvae_forward.1} parent=1 // pred_region
      _
    $region77: #{cvae_forward.1} parent=1 // pred_fallthru
      _
    %561 = vsyncpa [#allocation3], 1
    %562 = vsyncpa [#allocation5], 1

</llo_original>
